<compile_context>
chip_gen: v6e
topology: v6e:2x2x1
jax: 0.10.0
libtpu: 0.0.40
codegen_flags: <defaults>
</compile_context>

<pallas_src>
import functools

import jax
import jax.numpy as jnp
from jax.experimental import pallas as pl
from jax.experimental.pallas import tpu as pltpu


def se_kernel(x_ref, w1t_ref, w2t_ref, o_ref, *, hw, g):
    # x_ref/o_ref: (B, C//g, g*HW)  -- last dim lane-dense when possible
    # w1t_ref:     (C, C_red)       -- first Linear weight, pre-transposed
    # w2t_ref:     (C_red, C)       -- second Linear weight, pre-transposed
    x = x_ref[...]                      # keep native dtype for the big tensor
    b, cg, l = x.shape
    c = cg * g

    # ---- Squeeze: per-channel mean over spatial positions (f32 accumulation)
    xs = x.reshape(b, c, hw).astype(jnp.float32)        # no-op reshape if g == 1
    pooled = jnp.sum(xs, axis=-1) * (1.0 / hw)          # (B, C) f32

    # ---- Excitation on the VPU (C_red is tiny; avoid MXU push/pop latency)
    w1t = w1t_ref[...].astype(jnp.float32)              # (C, C_red)
    w2t = w2t_ref[...].astype(jnp.float32)              # (C_red, C)
    h = jnp.sum(pooled[:, :, None] * w1t[None, :, :], axis=1)   # (B, C_red)
    h = jnp.maximum(h, 0.0)                                      # ReLU
    y = jnp.sum(h[:, :, None] * w2t[None, :, :], axis=1)        # (B, C)
    gate = jax.nn.sigmoid(y).astype(x.dtype)                     # (B, C)

    # ---- Scale: broadcast the per-channel gate over spatial positions,
    #      full-lane-width store.
    if g == 1:
        o_ref[...] = x * gate[:, :, None]
    else:
        gate_rows = jnp.broadcast_to(
            gate.reshape(b, cg, g, 1), (b, cg, g, hw)
        ).reshape(b, cg, l)
        o_ref[...] = x * gate_rows


def se_layer(x, w1, w2):
    """SELayer forward.  x: (B, C, H, W); w1: (C//r, C); w2: (C, C//r)."""
    B, C, H, W = x.shape
    HW = H * W
    C_red = w1.shape[0]
    assert w1.shape == (C_red, C) and w2.shape == (C, C_red)

    # Choose a channel grouping g so the kernel's last (lane) dim is a
    # multiple of 128 -> unmasked full-width vector stores.
    if HW % 128 == 0:
        g = 1
    elif 128 % HW == 0 and C % (128 // HW) == 0:
        g = 128 // HW
    else:
        g = 1  # fallback: still correct, stores may be lane-masked
    Cg = C // g
    L = g * HW

    x_view = x.reshape(B, Cg, L)
    w1t = w1.T      # (C, C_red)  -- transpose once here, never in-kernel
    w2t = w2.T      # (C_red, C)

    # VMEM budget: double-buffered in+out blocks plus an f32 temp; floor at
    # 32 MiB (so v5e's 16 MiB default scoped limit never bites first), cap at
    # v7x's 64 MiB physical VMEM per TensorCore.
    x_bytes = x.size * x.dtype.itemsize
    vmem_needed = 4 * x_bytes + 2 * x.size * 4 + (1 << 20)
    vmem_limit = int(min(64 << 20, max(32 << 20, vmem_needed)))

    kernel = functools.partial(se_kernel, hw=HW, g=g)

    out = pl.pallas_call(
        kernel,
        out_shape=jax.ShapeDtypeStruct((B, Cg, L), x.dtype),
        grid=(1,),  # whole problem in one step: it is overhead/HBM-bound
        in_specs=[
            pl.BlockSpec((B, Cg, L), lambda i: (0, 0, 0)),
            pl.BlockSpec((C, C_red), lambda i: (0, 0)),
            pl.BlockSpec((C_red, C), lambda i: (0, 0)),
        ],
        out_specs=pl.BlockSpec((B, Cg, L), lambda i: (0, 0, 0)),
        compiler_params=pltpu.CompilerParams(
            dimension_semantics=("arbitrary",),
            vmem_limit_bytes=vmem_limit,
        ),
    )(x_view, w1t, w2t)

    return out.reshape(B, C, H, W)


def se_layer_ref(x, w1, w2):
    # pure-JAX reference of the PyTorch forward
    y = jnp.mean(x, axis=(2, 3))                   # (B, C)
    y = jnp.maximum(y @ w1.T, 0.0)                 # (B, C//r)
    y = jax.nn.sigmoid(y @ w2.T)                   # (B, C)
    return x * y[:, :, None, None]


if __name__ == "__main__":
    # Module config: channel=32, reduction=16 -> hidden = 2
    B, C, H, W = 2, 32, 16, 16
    reduction = 16
    C_red = C // reduction

    key = jax.random.PRNGKey(0)
    kx, k1, k2 = jax.random.split(key, 3)

    x = jax.random.normal(kx, (B, C, H, W), dtype=jnp.float32)
    # Deterministic Linear weights (no bias), PyTorch layout (out, in)
    w1 = jax.random.normal(k1, (C_red, C), dtype=jnp.float32) * (1.0 / C) ** 0.5
    w2 = jax.random.normal(k2, (C, C_red), dtype=jnp.float32) * (1.0 / C_red) ** 0.5

    out = jax.block_until_ready(se_layer(x, w1, w2))
    ref = se_layer_ref(x, w1, w2)

    assert out.shape == (B, C, H, W)
    assert jnp.allclose(out, ref, atol=1e-5, rtol=1e-5)

    print("KERNEL_OK")
</pallas_src>

<mosaic_0001>
module attributes {stable_mosaic.version = 11 : i64} {
  func.func @se_kernel(%arg0: i32, %arg1: memref<2x32x256xf32, #tpu.memory_space<vmem>>, %arg2: memref<32x2xf32, #tpu.memory_space<vmem>>, %arg3: memref<2x32xf32, #tpu.memory_space<vmem>>, %arg4: memref<2x32x256xf32, #tpu.memory_space<vmem>>) attributes {dimension_semantics = [#tpu.dimension_semantics<arbitrary>], iteration_bounds = array<i64: 1>, scalar_prefetch = 0 : i64, scratch_operands = 0 : i64, tpu.core_type = #tpu.core_type<tc>, window_params = [{pipeline_mode = #tpu.pipeline_mode<synchronous>, transform_indices = @transform_0, window_bounds = array<i64: 2, 32, 256>}, {pipeline_mode = #tpu.pipeline_mode<synchronous>, transform_indices = @transform_1, window_bounds = array<i64: 32, 2>}, {pipeline_mode = #tpu.pipeline_mode<synchronous>, transform_indices = @transform_2, window_bounds = array<i64: 2, 32>}, {pipeline_mode = #tpu.pipeline_mode<synchronous>, transform_indices = @transform_3, window_bounds = array<i64: 2, 32, 256>}]} {
    %c0 = arith.constant 0 : index
    %c0_0 = arith.constant 0 : index
    %c0_1 = arith.constant 0 : index
    %0 = vector.load %arg1[%c0, %c0_0, %c0_1] : memref<2x32x256xf32, #tpu.memory_space<vmem>>, vector<2x32x256xf32>
    %cst = arith.constant dense<0.000000e+00> : vector<2x32xf32>
    %1 = vector.multi_reduction <add>, %0, %cst [2] : vector<2x32x256xf32> to vector<2x32xf32>
    %cst_2 = arith.constant 3.906250e-03 : f32
    %2 = vector.broadcast %cst_2 : f32 to vector<2x32xf32>
    %3 = arith.mulf %1, %2 : vector<2x32xf32>
    %c0_3 = arith.constant 0 : index
    %c0_4 = arith.constant 0 : index
    %4 = vector.load %arg2[%c0_3, %c0_4] : memref<32x2xf32, #tpu.memory_space<vmem>>, vector<32x2xf32>
    %c0_5 = arith.constant 0 : index
    %c0_6 = arith.constant 0 : index
    %5 = vector.load %arg3[%c0_5, %c0_6] : memref<2x32xf32, #tpu.memory_space<vmem>>, vector<2x32xf32>
    %6 = vector.shape_cast %3 : vector<2x32xf32> to vector<2x32x1xf32>
    %7 = vector.shape_cast %4 : vector<32x2xf32> to vector<1x32x2xf32>
    %8 = vector.broadcast %6 : vector<2x32x1xf32> to vector<2x32x2xf32>
    %9 = vector.broadcast %7 : vector<1x32x2xf32> to vector<2x32x2xf32>
    %10 = arith.mulf %8, %9 : vector<2x32x2xf32>
    %cst_7 = arith.constant dense<0.000000e+00> : vector<2x2xf32>
    %11 = vector.multi_reduction <add>, %10, %cst_7 [1] : vector<2x32x2xf32> to vector<2x2xf32>
    %cst_8 = arith.constant 0.000000e+00 : f32
    %12 = vector.broadcast %cst_8 : f32 to vector<2x2xf32>
    %13 = arith.maximumf %11, %12 : vector<2x2xf32>
    %14 = vector.shape_cast %13 : vector<2x2xf32> to vector<2x2x1xf32>
    %15 = vector.shape_cast %5 : vector<2x32xf32> to vector<1x2x32xf32>
    %16 = vector.broadcast %14 : vector<2x2x1xf32> to vector<2x2x32xf32>
    %17 = vector.broadcast %15 : vector<1x2x32xf32> to vector<2x2x32xf32>
    %18 = arith.mulf %16, %17 : vector<2x2x32xf32>
    %cst_9 = arith.constant dense<0.000000e+00> : vector<2x32xf32>
    %19 = vector.multi_reduction <add>, %18, %cst_9 [1] : vector<2x2x32xf32> to vector<2x32xf32>
    %20 = arith.negf %19 : vector<2x32xf32>
    %21 = math.exp %20 : vector<2x32xf32>
    %cst_10 = arith.constant 1.000000e+00 : f32
    %22 = vector.broadcast %cst_10 : f32 to vector<2x32xf32>
    %23 = arith.addf %22, %21 : vector<2x32xf32>
    %24 = arith.divf %22, %23 : vector<2x32xf32>
    %25 = vector.shape_cast %24 : vector<2x32xf32> to vector<2x32x1xf32>
    %26 = vector.broadcast %25 : vector<2x32x1xf32> to vector<2x32x256xf32>
    %27 = arith.mulf %0, %26 : vector<2x32x256xf32>
    %c0_11 = arith.constant 0 : index
    %c0_12 = arith.constant 0 : index
    %c0_13 = arith.constant 0 : index
    %28 = vector.load %arg4[%c0_11, %c0_12, %c0_13] : memref<2x32x256xf32, #tpu.memory_space<vmem>>, vector<2x32x256xf32>
    tpu.vector_store %arg4[%c0_11, %c0_12, %c0_13], %27 {strides = array<i32>} : memref<2x32x256xf32, #tpu.memory_space<vmem>>, vector<2x32x256xf32>,
    return
  }
  func.func @transform_0(%arg0: i32) -> (i32, i32, i32) {
    %c0_i32 = arith.constant 0 : i32
    %c0_i32_0 = arith.constant 0 : i32
    %c0_i32_1 = arith.constant 0 : i32
    %c0_i32_2 = arith.constant 0 : i32
    return %c0_i32, %c0_i32_0, %c0_i32_1 : i32, i32, i32
  }
  func.func @transform_1(%arg0: i32) -> (i32, i32) {
    %c0_i32 = arith.constant 0 : i32
    %c0_i32_0 = arith.constant 0 : i32
    %c0_i32_1 = arith.constant 0 : i32
    return %c0_i32, %c0_i32_0 : i32, i32
  }
  func.func @transform_2(%arg0: i32) -> (i32, i32) {
    %c0_i32 = arith.constant 0 : i32
    %c0_i32_0 = arith.constant 0 : i32
    %c0_i32_1 = arith.constant 0 : i32
    return %c0_i32, %c0_i32_0 : i32, i32
  }
  func.func @transform_3(%arg0: i32) -> (i32, i32, i32) {
    %c0_i32 = arith.constant 0 : i32
    %c0_i32_0 = arith.constant 0 : i32
    %c0_i32_1 = arith.constant 0 : i32
    %c0_i32_2 = arith.constant 0 : i32
    return %c0_i32, %c0_i32_0, %c0_i32_1 : i32, i32, i32
  }
}

</mosaic_0001>

<llo_original>
// kernel: tpu_custom_call.1
$region0: #{tpu_custom_call.1}
  #allocation0 [shape = 'u32[]', space=smem, size = 0x4, offset = 0x4, fixed_abs, tag = 'smem constant byte address 0x4 - core index']
  #allocation1 [shape = 'u32[144,128]{1,0:T(1,128)}', space=vmem, size = 0x12000, scoped, tag = 'internal scratch']
  %s0 = inlined_call_operand.hbm [shape: f32[2,32,256], index: 0, kind: input, shape index: {}]
  %s1 = inlined_call_operand.vmem [shape: f32[32,2], index: 1, kind: input, shape index: {}]
  %s2 = inlined_call_operand.vmem [shape: f32[2,32], index: 2, kind: input, shape index: {}]
  %s3 = inlined_call_operand.hbm [shape: f32[2,32,256], index: 3, kind: output, shape index: {}]
  %s4 = sld [smem:[#allocation0]]
  $region26: #{tpu_custom_call.1} parent=0
    _
  %s6 = ssub.s32 1, %s4
  %s7 = scalar_select 0, %s6, %s4
  $region1: #{tpu_custom_call.1} parent=0
    #allocation2 [shape = 'u8[65536]{0}', space=vmem, size = 0x10000, scoped, tag = 'input window, operand 0, single buffered']
    #allocation3 [shape = 's32[1]{0}', space=sflag, size = 0x4, scoped, tag = 'scoped memory for tpu_custom_call.1']
    #allocation4 [shape = 's32[1]{0}', space=sflag, size = 0x4, scoped, tag = 'scoped memory for tpu_custom_call.1']
    #allocation5 [shape = 'u8[65536]{0}', space=vmem, size = 0x10000, scoped, tag = 'output window, operand 0, single buffered']
    %8 = vsyncpa [#allocation3], 0
    %9 = vsyncpa [#allocation4], 0
    // Predicated region
    $region2: #{tpu_custom_call.1} parent=1 // pred_check
      _
    $region3: #{tpu_custom_call.1} parent=1 // pred_check_branch
      %11 = sbr.rel (0) target = $region5
    $region4: #{tpu_custom_call.1} parent=1 // pred_region
      %s13 = ssub.s32 2048, 2048
      %14 = vsyncadd [#allocation3], %s13
      %s15 = sshll.u32 [#allocation2], 4
      %s16 = int_to_ptr.vmem [resolvable:$true] %s15
      %21 = dma.hbm_to_vmem [thread:$0]  %s0, 2048, %s16, [#allocation3], 256, 256, 16
    $region5: #{tpu_custom_call.1} parent=1 // pred_fallthru
      _
    // Predicated region
    $region6: #{tpu_custom_call.1} parent=1 // pred_check
      _
    $region7: #{tpu_custom_call.1} parent=1 // pred_check_branch
      %23 = sbr.rel (0) target = $region9
    $region8: #{tpu_custom_call.1} parent=1 // pred_region
      _
    $region9: #{tpu_custom_call.1} parent=1 // pred_fallthru
      _
    // Predicated region
    $region10: #{tpu_custom_call.1} parent=1 // pred_check
      _
    $region11: #{tpu_custom_call.1} parent=1 // pred_check_branch
      %25 = sbr.rel (0) target = $region13
    $region12: #{tpu_custom_call.1} parent=1 // pred_region
      _
    $region13: #{tpu_custom_call.1} parent=1 // pred_fallthru
      _
    // Predicated region
    $region14: #{tpu_custom_call.1} parent=1 // pred_check
      _
    $region15: #{tpu_custom_call.1} parent=1 // pred_check_branch
      %27 = sbr.rel (0) target = $region17
    $region16: #{tpu_custom_call.1} parent=1 // pred_region
      %28 = dma.done [#allocation3], 2048
    $region17: #{tpu_custom_call.1} parent=1 // pred_fallthru
      _
    %v29 = vld [vmem:[#allocation2] sm:$0xff]
    %v30 = vld [vmem:[#allocation2 + $0x8] sm:$0xff]
    %v31 = vld [vmem:[#allocation2 + $0x10] sm:$0xff]
    %v32 = vld [vmem:[#allocation2 + $0x18] sm:$0xff]
    %v33 = vld [vmem:[#allocation2 + $0x20] sm:$0xff]
    %v34 = vld [vmem:[#allocation2 + $0x28] sm:$0xff]
    %v35 = vld [vmem:[#allocation2 + $0x30] sm:$0xff]
    %v36 = vld [vmem:[#allocation2 + $0x38] sm:$0xff]
    %v37 = vld [vmem:[#allocation2 + $0x40] sm:$0xff]
    %v38 = vld [vmem:[#allocation2 + $0x48] sm:$0xff]
    %v39 = vld [vmem:[#allocation2 + $0x50] sm:$0xff]
    %v40 = vld [vmem:[#allocation2 + $0x58] sm:$0xff]
    %v41 = vld [vmem:[#allocation2 + $0x60] sm:$0xff]
    %v42 = vld [vmem:[#allocation2 + $0x68] sm:$0xff]
    %v43 = vld [vmem:[#allocation2 + $0x70] sm:$0xff]
    %v44 = vld [vmem:[#allocation2 + $0x78] sm:$0xff]
    %v45 = vadd.f32 %v29, %v30
    %46 = vadd.xlane.f32.xlu0 %v45
    %v47 = vpop.xlane.xlu0 %46
    %v48 = vadd.f32 %v31, %v32
    %49 = vadd.xlane.f32.xlu0 %v48
    %v50 = vpop.xlane.xlu0 %49
    %v51 = vadd.f32 %v33, %v34
    %52 = vadd.xlane.f32.xlu0 %v51
    %v53 = vpop.xlane.xlu0 %52
    %v54 = vadd.f32 %v35, %v36
    %55 = vadd.xlane.f32.xlu0 %v54
    %v56 = vpop.xlane.xlu0 %55
    %v57 = vadd.f32 %v37, %v38
    %58 = vadd.xlane.f32.xlu0 %v57
    %v59 = vpop.xlane.xlu0 %58
    %v60 = vadd.f32 %v39, %v40
    %61 = vadd.xlane.f32.xlu0 %v60
    %v62 = vpop.xlane.xlu0 %61
    %v63 = vadd.f32 %v41, %v42
    %64 = vadd.xlane.f32.xlu0 %v63
    %v65 = vpop.xlane.xlu0 %64
    %v66 = vadd.f32 %v43, %v44
    %67 = vadd.xlane.f32.xlu0 %v66
    %v68 = vpop.xlane.xlu0 %67
    %v69 = vmul.f32 %v47, 0.00390625
    %v70 = vmul.f32 %v50, 0.00390625
    %v71 = vmul.f32 %v53, 0.00390625
    %v72 = vmul.f32 %v56, 0.00390625
    %v73 = vmul.f32 %v59, 0.00390625
    %v74 = vmul.f32 %v62, 0.00390625
    %v75 = vmul.f32 %v65, 0.00390625
    %v76 = vmul.f32 %v68, 0.00390625
    %v77 = vld [vmem:[%s1] sm:$0xff]
    %v78 = vld [vmem:[%s1 + $0x8] sm:$0xff]
    %v79 = vld [vmem:[%s1 + $0x10] sm:$0xff]
    %v80 = vld [vmem:[%s1 + $0x18] sm:$0xff]
    %v81 = vld [vmem:[%s2] sm:$0x3]
    %v82 = vmul.f32 %v69, %v77
    %v83 = vmul.f32 %v70, %v78
    %v84 = vmul.f32 %v71, %v79
    %v85 = vmul.f32 %v72, %v80
    %v86 = vmul.f32 %v73, %v77
    %v87 = vmul.f32 %v74, %v78
    %v88 = vmul.f32 %v75, %v79
    %v89 = vmul.f32 %v76, %v80
    %vm90 = vcmask 15360
    %v91 = vsel %vm90, %v82, 0.0
    %v92 = vsel %vm90, %v83, 0.0
    %v93 = vadd.f32 %v91, %v92
    %v94 = vsel %vm90, %v84, 0.0
    %v95 = vadd.f32 %v93, %v94
    %v96 = vsel %vm90, %v85, 0.0
    %v97 = vadd.f32 %v95, %v96
    %v98 = vrot.slane %v97, 4
    %v99 = vadd.f32 %v97, %v98
    %v100 = vrot.slane %v99, 2
    %v101 = vadd.f32 %v99, %v100
    %v102 = vrot.slane %v101, 1
    %v103 = vadd.f32 %v101, %v102
    %v104 = vsel %vm90, %v86, 0.0
    %v105 = vsel %vm90, %v87, 0.0
    %v106 = vadd.f32 %v104, %v105
    %v107 = vsel %vm90, %v88, 0.0
    %v108 = vadd.f32 %v106, %v107
    %v109 = vsel %vm90, %v89, 0.0
    %v110 = vadd.f32 %v108, %v109
    %v111 = vrot.slane %v110, 4
    %v112 = vadd.f32 %v110, %v111
    %v113 = vrot.slane %v112, 2
    %v114 = vadd.f32 %v112, %v113
    %v115 = vrot.slane %v114, 1
    %v116 = vadd.f32 %v114, %v115
    %v117 = vmax.f32 %v103, 0.0
    %v118 = vmax.f32 %v116, 0.0
    %120 = vbcast.lane.b32.xlu0 %v117, 256
    %v121 = vpop.permute.xlu0 %120
    %123 = vbcast.lane.b32.xlu0 %v118, 256
    %v124 = vpop.permute.xlu0 %123
    %v125 = vmul.f32 %v121, %v81
    %v126 = vmul.f32 %v124, %v81
    %vm127 = vcmask 254976
    %v128 = vsel %vm127, %v125, 0.0
    %v129 = vrot.slane %v128, 4
    %v130 = vadd.f32 %v128, %v129
    %v131 = vrot.slane %v130, 2
    %v132 = vadd.f32 %v130, %v131
    %v133 = vrot.slane %v132, 1
    %v134 = vadd.f32 %v132, %v133
    %v135 = vsel %vm127, %v126, 0.0
    %v136 = vrot.slane %v135, 4
    %v137 = vadd.f32 %v135, %v136
    %v138 = vrot.slane %v137, 2
    %v139 = vadd.f32 %v137, %v138
    %v140 = vrot.slane %v139, 1
    %v141 = vadd.f32 %v139, %v140
    %v142 = vxor.u32 %v134, 2147483648
    %v143 = vxor.u32 %v141, 2147483648
    %v144 = vmul.f32 %v142, 1.442695
    %v145 = vpow.pop %v144
    %v146 = vmul.f32 %v143, 1.442695
    %v147 = vpow.pop %v146
    %v148 = vadd.f32 %v145, 1.0
    %v149 = vadd.f32 %v147, 1.0
    %v150 = vrcp.pop %v148
    %v151 = vmul.f32 1.0, %v150
    %v152 = vrcp.pop %v149
    %v153 = vmul.f32 1.0, %v152
    %155 = vbcast.lane.b32.xlu0 %v151, 256
    %v156 = vpop.permute.xlu0 %155
    %s158 = sor.u32 256, 8
    %159 = vbcast.lane.b32.xlu0 %v151, %s158
    %v160 = vpop.permute.xlu0 %159
    %s162 = sor.u32 256, 16
    %163 = vbcast.lane.b32.xlu0 %v151, %s162
    %v164 = vpop.permute.xlu0 %163
    %s166 = sor.u32 256, 24
    %167 = vbcast.lane.b32.xlu0 %v151, %s166
    %v168 = vpop.permute.xlu0 %167
    %170 = vbcast.lane.b32.xlu0 %v153, 256
    %v171 = vpop.permute.xlu0 %170
    %s173 = sor.u32 256, 8
    %174 = vbcast.lane.b32.xlu0 %v153, %s173
    %v175 = vpop.permute.xlu0 %174
    %s177 = sor.u32 256, 16
    %178 = vbcast.lane.b32.xlu0 %v153, %s177
    %v179 = vpop.permute.xlu0 %178
    %s181 = sor.u32 256, 24
    %182 = vbcast.lane.b32.xlu0 %v153, %s181
    %v183 = vpop.permute.xlu0 %182
    %v184 = vmul.f32 %v29, %v156
    %v185 = vmul.f32 %v30, %v156
    %v186 = vmul.f32 %v31, %v160
    %v187 = vmul.f32 %v32, %v160
    %v188 = vmul.f32 %v33, %v164
    %v189 = vmul.f32 %v34, %v164
    %v190 = vmul.f32 %v35, %v168
    %v191 = vmul.f32 %v36, %v168
    %v192 = vmul.f32 %v37, %v171
    %v193 = vmul.f32 %v38, %v171
    %v194 = vmul.f32 %v39, %v175
    %v195 = vmul.f32 %v40, %v175
    %v196 = vmul.f32 %v41, %v179
    %v197 = vmul.f32 %v42, %v179
    %v198 = vmul.f32 %v43, %v183
    %v199 = vmul.f32 %v44, %v183
    %200 = vst [vmem:[#allocation5] sm:$0xff] %v184
    %201 = vst [vmem:[#allocation5 + $0x8] sm:$0xff] %v185
    %202 = vst [vmem:[#allocation5 + $0x10] sm:$0xff] %v186
    %203 = vst [vmem:[#allocation5 + $0x18] sm:$0xff] %v187
    %204 = vst [vmem:[#allocation5 + $0x20] sm:$0xff] %v188
    %205 = vst [vmem:[#allocation5 + $0x28] sm:$0xff] %v189
    %206 = vst [vmem:[#allocation5 + $0x30] sm:$0xff] %v190
    %207 = vst [vmem:[#allocation5 + $0x38] sm:$0xff] %v191
    %208 = vst [vmem:[#allocation5 + $0x40] sm:$0xff] %v192
    %209 = vst [vmem:[#allocation5 + $0x48] sm:$0xff] %v193
    %210 = vst [vmem:[#allocation5 + $0x50] sm:$0xff] %v194
    %211 = vst [vmem:[#allocation5 + $0x58] sm:$0xff] %v195
    %212 = vst [vmem:[#allocation5 + $0x60] sm:$0xff] %v196
    %213 = vst [vmem:[#allocation5 + $0x68] sm:$0xff] %v197
    %214 = vst [vmem:[#allocation5 + $0x70] sm:$0xff] %v198
    %215 = vst [vmem:[#allocation5 + $0x78] sm:$0xff] %v199
    // Predicated region
    $region18: #{tpu_custom_call.1} parent=1 // pred_check
      _
    $region19: #{tpu_custom_call.1} parent=1 // pred_check_branch
      %217 = sbr.rel (0) target = $region21
    $region20: #{tpu_custom_call.1} parent=1 // pred_region
      %s219 = ssub.s32 2048, 2048
      %220 = vsyncadd [#allocation4], %s219
      %s221 = sshll.u32 [#allocation5], 4
      %s222 = int_to_ptr.vmem [resolvable:$true] %s221
      %227 = dma.vmem_to_hbm [thread:$0]  %s222, 2048, %s3, [#allocation4], 256, 256, 16
    $region21: #{tpu_custom_call.1} parent=1 // pred_fallthru
      _
    // Predicated region
    $region22: #{tpu_custom_call.1} parent=1 // pred_check
      _
    $region23: #{tpu_custom_call.1} parent=1 // pred_check_branch
      %229 = sbr.rel (0) target = $region25
    $region24: #{tpu_custom_call.1} parent=1 // pred_region
      %230 = dma.done [#allocation4], 2048
    $region25: #{tpu_custom_call.1} parent=1 // pred_fallthru
      _
    %231 = vsyncpa [#allocation3], 1
    %232 = vsyncpa [#allocation4], 1

</llo_original>
